<compile_context>
chip_gen: v7x
topology: tpu7x:2x2x1
jax: 0.10.0
libtpu: 0.0.40
codegen_flags: <defaults>
</compile_context>

<pallas_src>
import functools
import math

import jax
import jax.numpy as jnp
from jax.experimental import pallas as pl
from jax.experimental.pallas import tpu as pltpu

_EPS = 1e-5


def _conv_block_kernel(x_ref, w1_ref, b1_ref, g_ref, beta_ref, w2_ref, b2_ref,
                       mask_ref, out_ref, *, N, H, W, cin, cout):
    """Whole-problem kernel, single grid point, channel-major layout.

    x_ref    : (N, Cin,  H*W)   input, free reshape of NCHW
    w1_ref   : (Cout, 9*Cin)    conv1 weights, col index = (ky*3+kx)*Cin + ci
    b1_ref   : (Cout, 1)
    g_ref    : (Cout, 1)        BN gamma
    beta_ref : (Cout, 1)        BN beta
    w2_ref   : (Cout, 9*Cout)   conv2 weights
    b2_ref   : (Cout, 1)
    mask_ref : (9, H*W)         0/1 border-validity mask per tap
    out_ref  : (N, Cout, H*W)
    """
    HW = H * W
    # Tap k = ky*3 + kx reads x[h + ky - 1, w + kx - 1]; on the flattened
    # spatial axis that is a left-rotation by s = (ky-1)*W + (kx-1), masked
    # at row/column borders.  roll(x, shift)[p] = x[p - shift] => shift = -s.
    shifts = [(-((ky - 1) * W + (kx - 1))) % HW
              for ky in range(3) for kx in range(3)]
    mks = [mask_ref[k:k + 1, :] for k in range(9)]          # each (1, HW)

    w1 = w1_ref[...]                                        # (Cout, 9*Cin)
    w2 = w2_ref[...]                                        # (Cout, 9*Cout)
    b1 = b1_ref[...]                                        # (Cout, 1)
    b2 = b2_ref[...]                                        # (Cout, 1)

    def im2col(xs):
        # xs: (C, HW) -> (9*C, HW); 9 XLU lane-rolls + border masks, one concat.
        cols = []
        for k in range(9):
            if shifts[k] == 0:                              # center tap
                cols.append(xs)
            else:
                cols.append(pltpu.roll(xs, shift=shifts[k], axis=1) * mks[k])
        return jnp.concatenate(cols, axis=0)

    # ---- pass 1: Conv1 (one fused MXU matmul / sample) + bias + ReLU --------
    y1s = []
    s = jnp.zeros((cout, 1), jnp.float32)
    for n in range(N):
        xs = x_ref[n]                                       # (Cin, HW)
        y1 = jnp.dot(w1, im2col(xs),
                     preferred_element_type=jnp.float32) + b1
        y1 = jnp.maximum(y1, jnp.float32(0.0))              # (Cout, HW)
        y1s.append(y1)
        s = s + jnp.sum(y1, axis=1, keepdims=True)          # lane reduce

    inv_cnt = jnp.float32(1.0 / (N * HW))
    mean = s * inv_cnt                                      # (Cout, 1)

    # ---- BatchNorm batch stats (two-pass, mean-subtracted variance) ---------
    ss = jnp.zeros((cout, 1), jnp.float32)
    for n in range(N):
        d = y1s[n] - mean
        ss = ss + jnp.sum(d * d, axis=1, keepdims=True)
    var = ss * inv_cnt                                      # biased variance
    inv_std = jax.lax.rsqrt(var + jnp.float32(_EPS))
    scale = g_ref[...] * inv_std                            # (Cout, 1)
    shift = beta_ref[...] - mean * scale                    # (Cout, 1)

    # ---- pass 2: BN affine + Conv2 (fused matmul) + bias + ReLU -------------
    for n in range(N):
        y1n = y1s[n] * scale + shift                        # (Cout, HW)
        y2 = jnp.dot(w2, im2col(y1n),
                     preferred_element_type=jnp.float32) + b2
        out_ref[n] = jnp.maximum(y2, jnp.float32(0.0))      # lane-dense store


def conv_block(x_nchw, w1, b1, gamma, beta, w2, b2):
    """ConvBlock forward. x_nchw: (N, Cin, H, W) f32; PyTorch weight layouts
    w1: (Cout, Cin, 3, 3), w2: (Cout, Cout, 3, 3). Returns (N, Cout, H, W)."""
    N, cin, H, W = x_nchw.shape
    cout = w1.shape[0]
    HW = H * W

    # ---- glue: free reshapes + tiny weight packing (no activation transpose)
    x_flat = x_nchw.reshape(N, cin, HW).astype(jnp.float32)
    # (Cout, Cin, ky, kx) -> (Cout, ky, kx, Cin) -> (Cout, 9*Cin)
    w1p = jnp.transpose(w1, (0, 2, 3, 1)).reshape(cout, 9 * cin).astype(jnp.float32)
    w2p = jnp.transpose(w2, (0, 2, 3, 1)).reshape(cout, 9 * cout).astype(jnp.float32)
    b1p = b1.reshape(cout, 1).astype(jnp.float32)
    b2p = b2.reshape(cout, 1).astype(jnp.float32)
    gp = gamma.reshape(cout, 1).astype(jnp.float32)
    bp = beta.reshape(cout, 1).astype(jnp.float32)

    # Precomputed 0/1 border-validity masks per tap (9, HW).
    hh = jnp.arange(HW, dtype=jnp.int32) // W
    ww = jnp.arange(HW, dtype=jnp.int32) % W
    mask_rows = []
    for ky in range(3):
        for kx in range(3):
            dy, dx = ky - 1, kx - 1
            valid = ((hh + dy >= 0) & (hh + dy < H) &
                     (ww + dx >= 0) & (ww + dx < W))
            mask_rows.append(valid.astype(jnp.float32))
    masks = jnp.stack(mask_rows, axis=0)                    # (9, HW)

    kernel = functools.partial(_conv_block_kernel,
                               N=N, H=H, W=W, cin=cin, cout=cout)
    vmem = pl.BlockSpec(memory_space=pltpu.MemorySpace.VMEM)
    out_flat = pl.pallas_call(
        kernel,
        out_shape=jax.ShapeDtypeStruct((N, cout, HW), jnp.float32),
        in_specs=[vmem] * 8,
        out_specs=vmem,
    )(x_flat, w1p, b1p, gp, bp, w2p, b2p, masks)

    return out_flat.reshape(N, cout, H, W)                  # free reshape


def reference(x, w1, b1, gamma, beta, w2, b2):
    """Pure-JAX reference matching PyTorch semantics (NCHW)."""
    dn = ('NCHW', 'OIHW', 'NCHW')
    y = jax.lax.conv_general_dilated(x, w1, (1, 1), ((1, 1), (1, 1)),
                                     dimension_numbers=dn,
                                     precision=jax.lax.Precision.HIGHEST)
    y = jnp.maximum(y + b1[None, :, None, None], 0.0)
    mean = jnp.mean(y, axis=(0, 2, 3), keepdims=True)
    var = jnp.mean((y - mean) ** 2, axis=(0, 2, 3), keepdims=True)
    y = (y - mean) / jnp.sqrt(var + _EPS)
    y = y * gamma[None, :, None, None] + beta[None, :, None, None]
    y = jax.lax.conv_general_dilated(y, w2, (1, 1), ((1, 1), (1, 1)),
                                     dimension_numbers=dn,
                                     precision=jax.lax.Precision.HIGHEST)
    return jnp.maximum(y + b2[None, :, None, None], 0.0)


if __name__ == "__main__":
    N, cin, cout, H, W = 2, 4, 8, 16, 16

    key = jax.random.PRNGKey(0)
    k1, k2, k3, k4, kx = jax.random.split(key, 5)

    # Deterministic init mirroring nn.Conv2d defaults (uniform +/- 1/sqrt(fan_in)).
    lim1 = 1.0 / math.sqrt(cin * 9)
    lim2 = 1.0 / math.sqrt(cout * 9)
    w1 = jax.random.uniform(k1, (cout, cin, 3, 3), jnp.float32, -lim1, lim1)
    b1 = jax.random.uniform(k2, (cout,), jnp.float32, -lim1, lim1)
    w2 = jax.random.uniform(k3, (cout, cout, 3, 3), jnp.float32, -lim2, lim2)
    b2 = jax.random.uniform(k4, (cout,), jnp.float32, -lim2, lim2)
    gamma = jnp.ones((cout,), jnp.float32)   # BatchNorm2d default weight
    beta = jnp.zeros((cout,), jnp.float32)   # BatchNorm2d default bias

    x = jax.random.normal(kx, (N, cin, H, W), jnp.float32)

    out = conv_block(x, w1, b1, gamma, beta, w2, b2)
    out = jax.block_until_ready(out)

    ref = reference(x, w1, b1, gamma, beta, w2, b2)
    if out.shape != ref.shape:
        raise AssertionError(f"shape mismatch: {out.shape} vs {ref.shape}")
    if not bool(jnp.allclose(out, ref, rtol=1e-3, atol=1e-3)):
        max_err = float(jnp.max(jnp.abs(out - ref)))
        raise AssertionError(f"kernel mismatch, max abs err = {max_err}")

    print("KERNEL_OK")
</pallas_src>

<mosaic_0001>
module attributes {stable_mosaic.version = 11 : i64} {
  func.func @_conv_block_kernel(%arg0: memref<2x4x256xf32, #tpu.memory_space<vmem>>, %arg1: memref<8x36xf32, #tpu.memory_space<vmem>>, %arg2: memref<8x1xf32, #tpu.memory_space<vmem>>, %arg3: memref<8x1xf32, #tpu.memory_space<vmem>>, %arg4: memref<8x1xf32, #tpu.memory_space<vmem>>, %arg5: memref<8x72xf32, #tpu.memory_space<vmem>>, %arg6: memref<8x1xf32, #tpu.memory_space<vmem>>, %arg7: memref<9x256xf32, #tpu.memory_space<vmem>>, %arg8: memref<2x8x256xf32, #tpu.memory_space<vmem>>) attributes {dimension_semantics = [], scalar_prefetch = 0 : i64, scratch_operands = 0 : i64, tpu.core_type = #tpu.core_type<tc>} {
    %c0 = arith.constant 0 : index
    %c0_0 = arith.constant 0 : index
    %0 = vector.load %arg7[%c0, %c0_0] : memref<9x256xf32, #tpu.memory_space<vmem>>, vector<1x256xf32>
    %c1 = arith.constant 1 : index
    %c0_1 = arith.constant 0 : index
    %1 = vector.load %arg7[%c1, %c0_1] : memref<9x256xf32, #tpu.memory_space<vmem>>, vector<1x256xf32>
    %c2 = arith.constant 2 : index
    %c0_2 = arith.constant 0 : index
    %2 = vector.load %arg7[%c2, %c0_2] : memref<9x256xf32, #tpu.memory_space<vmem>>, vector<1x256xf32>
    %c3 = arith.constant 3 : index
    %c0_3 = arith.constant 0 : index
    %3 = vector.load %arg7[%c3, %c0_3] : memref<9x256xf32, #tpu.memory_space<vmem>>, vector<1x256xf32>
    %c5 = arith.constant 5 : index
    %c0_4 = arith.constant 0 : index
    %4 = vector.load %arg7[%c5, %c0_4] : memref<9x256xf32, #tpu.memory_space<vmem>>, vector<1x256xf32>
    %c6 = arith.constant 6 : index
    %c0_5 = arith.constant 0 : index
    %5 = vector.load %arg7[%c6, %c0_5] : memref<9x256xf32, #tpu.memory_space<vmem>>, vector<1x256xf32>
    %c7 = arith.constant 7 : index
    %c0_6 = arith.constant 0 : index
    %6 = vector.load %arg7[%c7, %c0_6] : memref<9x256xf32, #tpu.memory_space<vmem>>, vector<1x256xf32>
    %c8 = arith.constant 8 : index
    %c0_7 = arith.constant 0 : index
    %7 = vector.load %arg7[%c8, %c0_7] : memref<9x256xf32, #tpu.memory_space<vmem>>, vector<1x256xf32>
    %c0_8 = arith.constant 0 : index
    %c0_9 = arith.constant 0 : index
    %8 = vector.load %arg1[%c0_8, %c0_9] : memref<8x36xf32, #tpu.memory_space<vmem>>, vector<8x36xf32>
    %c0_10 = arith.constant 0 : index
    %c0_11 = arith.constant 0 : index
    %9 = vector.load %arg5[%c0_10, %c0_11] : memref<8x72xf32, #tpu.memory_space<vmem>>, vector<8x72xf32>
    %c0_12 = arith.constant 0 : index
    %c0_13 = arith.constant 0 : index
    %10 = vector.load %arg2[%c0_12, %c0_13] : memref<8x1xf32, #tpu.memory_space<vmem>>, vector<8x1xf32>
    %c0_14 = arith.constant 0 : index
    %c0_15 = arith.constant 0 : index
    %11 = vector.load %arg6[%c0_14, %c0_15] : memref<8x1xf32, #tpu.memory_space<vmem>>, vector<8x1xf32>
    %cst = arith.constant 0.000000e+00 : f32
    %12 = vector.broadcast %cst : f32 to vector<8x1xf32>
    %c0_16 = arith.constant 0 : index
    %c0_17 = arith.constant 0 : index
    %c0_18 = arith.constant 0 : index
    %13 = vector.load %arg0[%c0_16, %c0_17, %c0_18] : memref<2x4x256xf32, #tpu.memory_space<vmem>>, vector<1x4x256xf32>
    %14 = vector.shape_cast %13 : vector<1x4x256xf32> to vector<4x256xf32>
    %c17_i32 = arith.constant 17 : i32
    %15 = tpu.dynamic_rotate %14 by %c17_i32 dim 1 : vector<4x256xf32>, i32 -> vector<4x256xf32>
    %16 = vector.broadcast %0 : vector<1x256xf32> to vector<4x256xf32>
    %17 = arith.mulf %15, %16 : vector<4x256xf32>
    %c16_i32 = arith.constant 16 : i32
    %18 = tpu.dynamic_rotate %14 by %c16_i32 dim 1 : vector<4x256xf32>, i32 -> vector<4x256xf32>
    %19 = vector.broadcast %1 : vector<1x256xf32> to vector<4x256xf32>
    %20 = arith.mulf %18, %19 : vector<4x256xf32>
    %c15_i32 = arith.constant 15 : i32
    %21 = tpu.dynamic_rotate %14 by %c15_i32 dim 1 : vector<4x256xf32>, i32 -> vector<4x256xf32>
    %22 = vector.broadcast %2 : vector<1x256xf32> to vector<4x256xf32>
    %23 = arith.mulf %21, %22 : vector<4x256xf32>
    %c1_i32 = arith.constant 1 : i32
    %24 = tpu.dynamic_rotate %14 by %c1_i32 dim 1 : vector<4x256xf32>, i32 -> vector<4x256xf32>
    %25 = vector.broadcast %3 : vector<1x256xf32> to vector<4x256xf32>
    %26 = arith.mulf %24, %25 : vector<4x256xf32>
    %c255_i32 = arith.constant 255 : i32
    %27 = tpu.dynamic_rotate %14 by %c255_i32 dim 1 : vector<4x256xf32>, i32 -> vector<4x256xf32>
    %28 = vector.broadcast %4 : vector<1x256xf32> to vector<4x256xf32>
    %29 = arith.mulf %27, %28 : vector<4x256xf32>
    %c241_i32 = arith.constant 241 : i32
    %30 = tpu.dynamic_rotate %14 by %c241_i32 dim 1 : vector<4x256xf32>, i32 -> vector<4x256xf32>
    %31 = vector.broadcast %5 : vector<1x256xf32> to vector<4x256xf32>
    %32 = arith.mulf %30, %31 : vector<4x256xf32>
    %c240_i32 = arith.constant 240 : i32
    %33 = tpu.dynamic_rotate %14 by %c240_i32 dim 1 : vector<4x256xf32>, i32 -> vector<4x256xf32>
    %34 = vector.broadcast %6 : vector<1x256xf32> to vector<4x256xf32>
    %35 = arith.mulf %33, %34 : vector<4x256xf32>
    %c239_i32 = arith.constant 239 : i32
    %36 = tpu.dynamic_rotate %14 by %c239_i32 dim 1 : vector<4x256xf32>, i32 -> vector<4x256xf32>
    %37 = vector.broadcast %7 : vector<1x256xf32> to vector<4x256xf32>
    %38 = arith.mulf %36, %37 : vector<4x256xf32>
    %39 = tpu.concatenate %17, %20, %23, %26, %14, %29, %32, %35, %38 in 0 : vector<4x256xf32>, vector<4x256xf32>, vector<4x256xf32>, vector<4x256xf32>, vector<4x256xf32>, vector<4x256xf32>, vector<4x256xf32>, vector<4x256xf32>, vector<4x256xf32> -> vector<36x256xf32>
    %cst_19 = arith.constant dense<0.000000e+00> : vector<8x256xf32>
    %40 = tpu.matmul %8, %39, %cst_19 {dimension_numbers = #tpu.dot_dimension_numbers<[1], [0], [0], [1], [0, 0, 1, 1], [], []>} : vector<8x36xf32>, vector<36x256xf32>, vector<8x256xf32> -> vector<8x256xf32>
    %41 = vector.broadcast %10 : vector<8x1xf32> to vector<8x256xf32>
    %42 = arith.addf %40, %41 : vector<8x256xf32>
    %cst_20 = arith.constant 0.000000e+00 : f32
    %43 = vector.broadcast %cst_20 : f32 to vector<8x256xf32>
    %44 = arith.maximumf %42, %43 : vector<8x256xf32>
    %cst_21 = arith.constant dense<0.000000e+00> : vector<8xf32>
    %45 = vector.multi_reduction <add>, %44, %cst_21 [1] : vector<8x256xf32> to vector<8xf32>
    %46 = vector.shape_cast %45 : vector<8xf32> to vector<8x1xf32>
    %47 = arith.addf %12, %46 : vector<8x1xf32>
    %c1_22 = arith.constant 1 : index
    %c0_23 = arith.constant 0 : index
    %c0_24 = arith.constant 0 : index
    %48 = vector.load %arg0[%c1_22, %c0_23, %c0_24] : memref<2x4x256xf32, #tpu.memory_space<vmem>>, vector<1x4x256xf32>
    %49 = vector.shape_cast %48 : vector<1x4x256xf32> to vector<4x256xf32>
    %c17_i32_25 = arith.constant 17 : i32
    %50 = tpu.dynamic_rotate %49 by %c17_i32_25 dim 1 : vector<4x256xf32>, i32 -> vector<4x256xf32>
    %51 = vector.broadcast %0 : vector<1x256xf32> to vector<4x256xf32>
    %52 = arith.mulf %50, %51 : vector<4x256xf32>
    %c16_i32_26 = arith.constant 16 : i32
    %53 = tpu.dynamic_rotate %49 by %c16_i32_26 dim 1 : vector<4x256xf32>, i32 -> vector<4x256xf32>
    %54 = vector.broadcast %1 : vector<1x256xf32> to vector<4x256xf32>
    %55 = arith.mulf %53, %54 : vector<4x256xf32>
    %c15_i32_27 = arith.constant 15 : i32
    %56 = tpu.dynamic_rotate %49 by %c15_i32_27 dim 1 : vector<4x256xf32>, i32 -> vector<4x256xf32>
    %57 = vector.broadcast %2 : vector<1x256xf32> to vector<4x256xf32>
    %58 = arith.mulf %56, %57 : vector<4x256xf32>
    %c1_i32_28 = arith.constant 1 : i32
    %59 = tpu.dynamic_rotate %49 by %c1_i32_28 dim 1 : vector<4x256xf32>, i32 -> vector<4x256xf32>
    %60 = vector.broadcast %3 : vector<1x256xf32> to vector<4x256xf32>
    %61 = arith.mulf %59, %60 : vector<4x256xf32>
    %c255_i32_29 = arith.constant 255 : i32
    %62 = tpu.dynamic_rotate %49 by %c255_i32_29 dim 1 : vector<4x256xf32>, i32 -> vector<4x256xf32>
    %63 = vector.broadcast %4 : vector<1x256xf32> to vector<4x256xf32>
    %64 = arith.mulf %62, %63 : vector<4x256xf32>
    %c241_i32_30 = arith.constant 241 : i32
    %65 = tpu.dynamic_rotate %49 by %c241_i32_30 dim 1 : vector<4x256xf32>, i32 -> vector<4x256xf32>
    %66 = vector.broadcast %5 : vector<1x256xf32> to vector<4x256xf32>
    %67 = arith.mulf %65, %66 : vector<4x256xf32>
    %c240_i32_31 = arith.constant 240 : i32
    %68 = tpu.dynamic_rotate %49 by %c240_i32_31 dim 1 : vector<4x256xf32>, i32 -> vector<4x256xf32>
    %69 = vector.broadcast %6 : vector<1x256xf32> to vector<4x256xf32>
    %70 = arith.mulf %68, %69 : vector<4x256xf32>
    %c239_i32_32 = arith.constant 239 : i32
    %71 = tpu.dynamic_rotate %49 by %c239_i32_32 dim 1 : vector<4x256xf32>, i32 -> vector<4x256xf32>
    %72 = vector.broadcast %7 : vector<1x256xf32> to vector<4x256xf32>
    %73 = arith.mulf %71, %72 : vector<4x256xf32>
    %74 = tpu.concatenate %52, %55, %58, %61, %49, %64, %67, %70, %73 in 0 : vector<4x256xf32>, vector<4x256xf32>, vector<4x256xf32>, vector<4x256xf32>, vector<4x256xf32>, vector<4x256xf32>, vector<4x256xf32>, vector<4x256xf32>, vector<4x256xf32> -> vector<36x256xf32>
    %cst_33 = arith.constant dense<0.000000e+00> : vector<8x256xf32>
    %75 = tpu.matmul %8, %74, %cst_33 {dimension_numbers = #tpu.dot_dimension_numbers<[1], [0], [0], [1], [0, 0, 1, 1], [], []>} : vector<8x36xf32>, vector<36x256xf32>, vector<8x256xf32> -> vector<8x256xf32>
    %76 = vector.broadcast %10 : vector<8x1xf32> to vector<8x256xf32>
    %77 = arith.addf %75, %76 : vector<8x256xf32>
    %cst_34 = arith.constant 0.000000e+00 : f32
    %78 = vector.broadcast %cst_34 : f32 to vector<8x256xf32>
    %79 = arith.maximumf %77, %78 : vector<8x256xf32>
    %cst_35 = arith.constant dense<0.000000e+00> : vector<8xf32>
    %80 = vector.multi_reduction <add>, %79, %cst_35 [1] : vector<8x256xf32> to vector<8xf32>
    %81 = vector.shape_cast %80 : vector<8xf32> to vector<8x1xf32>
    %82 = arith.addf %47, %81 : vector<8x1xf32>
    %cst_36 = arith.constant 0.001953125 : f32
    %83 = vector.broadcast %cst_36 : f32 to vector<8x1xf32>
    %84 = arith.mulf %82, %83 : vector<8x1xf32>
    %cst_37 = arith.constant 0.000000e+00 : f32
    %85 = vector.broadcast %cst_37 : f32 to vector<8x1xf32>
    %86 = vector.broadcast %84 : vector<8x1xf32> to vector<8x256xf32>
    %87 = arith.subf %44, %86 : vector<8x256xf32>
    %88 = arith.mulf %87, %87 : vector<8x256xf32>
    %cst_38 = arith.constant dense<0.000000e+00> : vector<8xf32>
    %89 = vector.multi_reduction <add>, %88, %cst_38 [1] : vector<8x256xf32> to vector<8xf32>
    %90 = vector.shape_cast %89 : vector<8xf32> to vector<8x1xf32>
    %91 = arith.addf %85, %90 : vector<8x1xf32>
    %92 = vector.broadcast %84 : vector<8x1xf32> to vector<8x256xf32>
    %93 = arith.subf %79, %92 : vector<8x256xf32>
    %94 = arith.mulf %93, %93 : vector<8x256xf32>
    %cst_39 = arith.constant dense<0.000000e+00> : vector<8xf32>
    %95 = vector.multi_reduction <add>, %94, %cst_39 [1] : vector<8x256xf32> to vector<8xf32>
    %96 = vector.shape_cast %95 : vector<8xf32> to vector<8x1xf32>
    %97 = arith.addf %91, %96 : vector<8x1xf32>
    %cst_40 = arith.constant 0.001953125 : f32
    %98 = vector.broadcast %cst_40 : f32 to vector<8x1xf32>
    %99 = arith.mulf %97, %98 : vector<8x1xf32>
    %cst_41 = arith.constant 9.99999974E-6 : f32
    %100 = vector.broadcast %cst_41 : f32 to vector<8x1xf32>
    %101 = arith.addf %99, %100 : vector<8x1xf32>
    %102 = math.rsqrt %101 : vector<8x1xf32>
    %c0_42 = arith.constant 0 : index
    %c0_43 = arith.constant 0 : index
    %103 = vector.load %arg3[%c0_42, %c0_43] : memref<8x1xf32, #tpu.memory_space<vmem>>, vector<8x1xf32>
    %104 = arith.mulf %103, %102 : vector<8x1xf32>
    %c0_44 = arith.constant 0 : index
    %c0_45 = arith.constant 0 : index
    %105 = vector.load %arg4[%c0_44, %c0_45] : memref<8x1xf32, #tpu.memory_space<vmem>>, vector<8x1xf32>
    %106 = arith.mulf %84, %104 : vector<8x1xf32>
    %107 = arith.subf %105, %106 : vector<8x1xf32>
    %108 = vector.broadcast %104 : vector<8x1xf32> to vector<8x256xf32>
    %109 = arith.mulf %44, %108 : vector<8x256xf32>
    %110 = vector.broadcast %107 : vector<8x1xf32> to vector<8x256xf32>
    %111 = arith.addf %109, %110 : vector<8x256xf32>
    %c17_i32_46 = arith.constant 17 : i32
    %112 = tpu.dynamic_rotate %111 by %c17_i32_46 dim 1 : vector<8x256xf32>, i32 -> vector<8x256xf32>
    %113 = vector.broadcast %0 : vector<1x256xf32> to vector<8x256xf32>
    %114 = arith.mulf %112, %113 : vector<8x256xf32>
    %c16_i32_47 = arith.constant 16 : i32
    %115 = tpu.dynamic_rotate %111 by %c16_i32_47 dim 1 : vector<8x256xf32>, i32 -> vector<8x256xf32>
    %116 = vector.broadcast %1 : vector<1x256xf32> to vector<8x256xf32>
    %117 = arith.mulf %115, %116 : vector<8x256xf32>
    %c15_i32_48 = arith.constant 15 : i32
    %118 = tpu.dynamic_rotate %111 by %c15_i32_48 dim 1 : vector<8x256xf32>, i32 -> vector<8x256xf32>
    %119 = vector.broadcast %2 : vector<1x256xf32> to vector<8x256xf32>
    %120 = arith.mulf %118, %119 : vector<8x256xf32>
    %c1_i32_49 = arith.constant 1 : i32
    %121 = tpu.dynamic_rotate %111 by %c1_i32_49 dim 1 : vector<8x256xf32>, i32 -> vector<8x256xf32>
    %122 = vector.broadcast %3 : vector<1x256xf32> to vector<8x256xf32>
    %123 = arith.mulf %121, %122 : vector<8x256xf32>
    %c255_i32_50 = arith.constant 255 : i32
    %124 = tpu.dynamic_rotate %111 by %c255_i32_50 dim 1 : vector<8x256xf32>, i32 -> vector<8x256xf32>
    %125 = vector.broadcast %4 : vector<1x256xf32> to vector<8x256xf32>
    %126 = arith.mulf %124, %125 : vector<8x256xf32>
    %c241_i32_51 = arith.constant 241 : i32
    %127 = tpu.dynamic_rotate %111 by %c241_i32_51 dim 1 : vector<8x256xf32>, i32 -> vector<8x256xf32>
    %128 = vector.broadcast %5 : vector<1x256xf32> to vector<8x256xf32>
    %129 = arith.mulf %127, %128 : vector<8x256xf32>
    %c240_i32_52 = arith.constant 240 : i32
    %130 = tpu.dynamic_rotate %111 by %c240_i32_52 dim 1 : vector<8x256xf32>, i32 -> vector<8x256xf32>
    %131 = vector.broadcast %6 : vector<1x256xf32> to vector<8x256xf32>
    %132 = arith.mulf %130, %131 : vector<8x256xf32>
    %c239_i32_53 = arith.constant 239 : i32
    %133 = tpu.dynamic_rotate %111 by %c239_i32_53 dim 1 : vector<8x256xf32>, i32 -> vector<8x256xf32>
    %134 = vector.broadcast %7 : vector<1x256xf32> to vector<8x256xf32>
    %135 = arith.mulf %133, %134 : vector<8x256xf32>
    %136 = tpu.concatenate %114, %117, %120, %123, %111, %126, %129, %132, %135 in 0 : vector<8x256xf32>, vector<8x256xf32>, vector<8x256xf32>, vector<8x256xf32>, vector<8x256xf32>, vector<8x256xf32>, vector<8x256xf32>, vector<8x256xf32>, vector<8x256xf32> -> vector<72x256xf32>
    %cst_54 = arith.constant dense<0.000000e+00> : vector<8x256xf32>
    %137 = tpu.matmul %9, %136, %cst_54 {dimension_numbers = #tpu.dot_dimension_numbers<[1], [0], [0], [1], [0, 0, 1, 1], [], []>} : vector<8x72xf32>, vector<72x256xf32>, vector<8x256xf32> -> vector<8x256xf32>
    %138 = vector.broadcast %11 : vector<8x1xf32> to vector<8x256xf32>
    %139 = arith.addf %137, %138 : vector<8x256xf32>
    %cst_55 = arith.constant 0.000000e+00 : f32
    %140 = vector.broadcast %cst_55 : f32 to vector<8x256xf32>
    %141 = arith.maximumf %139, %140 : vector<8x256xf32>
    %c0_56 = arith.constant 0 : index
    %c0_57 = arith.constant 0 : index
    %c0_58 = arith.constant 0 : index
    %142 = vector.load %arg8[%c0_56, %c0_57, %c0_58] : memref<2x8x256xf32, #tpu.memory_space<vmem>>, vector<1x8x256xf32>
    %143 = vector.shape_cast %142 : vector<1x8x256xf32> to vector<8x256xf32>
    %144 = vector.shape_cast %141 : vector<8x256xf32> to vector<1x8x256xf32>
    tpu.vector_store %arg8[%c0_56, %c0_57, %c0_58], %144 {strides = array<i32>} : memref<2x8x256xf32, #tpu.memory_space<vmem>>, vector<1x8x256xf32>,
    %145 = vector.broadcast %104 : vector<8x1xf32> to vector<8x256xf32>
    %146 = arith.mulf %79, %145 : vector<8x256xf32>
    %147 = vector.broadcast %107 : vector<8x1xf32> to vector<8x256xf32>
    %148 = arith.addf %146, %147 : vector<8x256xf32>
    %c17_i32_59 = arith.constant 17 : i32
    %149 = tpu.dynamic_rotate %148 by %c17_i32_59 dim 1 : vector<8x256xf32>, i32 -> vector<8x256xf32>
    %150 = vector.broadcast %0 : vector<1x256xf32> to vector<8x256xf32>
    %151 = arith.mulf %149, %150 : vector<8x256xf32>
    %c16_i32_60 = arith.constant 16 : i32
    %152 = tpu.dynamic_rotate %148 by %c16_i32_60 dim 1 : vector<8x256xf32>, i32 -> vector<8x256xf32>
    %153 = vector.broadcast %1 : vector<1x256xf32> to vector<8x256xf32>
    %154 = arith.mulf %152, %153 : vector<8x256xf32>
    %c15_i32_61 = arith.constant 15 : i32
    %155 = tpu.dynamic_rotate %148 by %c15_i32_61 dim 1 : vector<8x256xf32>, i32 -> vector<8x256xf32>
    %156 = vector.broadcast %2 : vector<1x256xf32> to vector<8x256xf32>
    %157 = arith.mulf %155, %156 : vector<8x256xf32>
    %c1_i32_62 = arith.constant 1 : i32
    %158 = tpu.dynamic_rotate %148 by %c1_i32_62 dim 1 : vector<8x256xf32>, i32 -> vector<8x256xf32>
    %159 = vector.broadcast %3 : vector<1x256xf32> to vector<8x256xf32>
    %160 = arith.mulf %158, %159 : vector<8x256xf32>
    %c255_i32_63 = arith.constant 255 : i32
    %161 = tpu.dynamic_rotate %148 by %c255_i32_63 dim 1 : vector<8x256xf32>, i32 -> vector<8x256xf32>
    %162 = vector.broadcast %4 : vector<1x256xf32> to vector<8x256xf32>
    %163 = arith.mulf %161, %162 : vector<8x256xf32>
    %c241_i32_64 = arith.constant 241 : i32
    %164 = tpu.dynamic_rotate %148 by %c241_i32_64 dim 1 : vector<8x256xf32>, i32 -> vector<8x256xf32>
    %165 = vector.broadcast %5 : vector<1x256xf32> to vector<8x256xf32>
    %166 = arith.mulf %164, %165 : vector<8x256xf32>
    %c240_i32_65 = arith.constant 240 : i32
    %167 = tpu.dynamic_rotate %148 by %c240_i32_65 dim 1 : vector<8x256xf32>, i32 -> vector<8x256xf32>
    %168 = vector.broadcast %6 : vector<1x256xf32> to vector<8x256xf32>
    %169 = arith.mulf %167, %168 : vector<8x256xf32>
    %c239_i32_66 = arith.constant 239 : i32
    %170 = tpu.dynamic_rotate %148 by %c239_i32_66 dim 1 : vector<8x256xf32>, i32 -> vector<8x256xf32>
    %171 = vector.broadcast %7 : vector<1x256xf32> to vector<8x256xf32>
    %172 = arith.mulf %170, %171 : vector<8x256xf32>
    %173 = tpu.concatenate %151, %154, %157, %160, %148, %163, %166, %169, %172 in 0 : vector<8x256xf32>, vector<8x256xf32>, vector<8x256xf32>, vector<8x256xf32>, vector<8x256xf32>, vector<8x256xf32>, vector<8x256xf32>, vector<8x256xf32>, vector<8x256xf32> -> vector<72x256xf32>
    %cst_67 = arith.constant dense<0.000000e+00> : vector<8x256xf32>
    %174 = tpu.matmul %9, %173, %cst_67 {dimension_numbers = #tpu.dot_dimension_numbers<[1], [0], [0], [1], [0, 0, 1, 1], [], []>} : vector<8x72xf32>, vector<72x256xf32>, vector<8x256xf32> -> vector<8x256xf32>
    %175 = vector.broadcast %11 : vector<8x1xf32> to vector<8x256xf32>
    %176 = arith.addf %174, %175 : vector<8x256xf32>
    %cst_68 = arith.constant 0.000000e+00 : f32
    %177 = vector.broadcast %cst_68 : f32 to vector<8x256xf32>
    %178 = arith.maximumf %176, %177 : vector<8x256xf32>
    %c1_69 = arith.constant 1 : index
    %c0_70 = arith.constant 0 : index
    %c0_71 = arith.constant 0 : index
    %179 = vector.load %arg8[%c1_69, %c0_70, %c0_71] : memref<2x8x256xf32, #tpu.memory_space<vmem>>, vector<1x8x256xf32>
    %180 = vector.shape_cast %179 : vector<1x8x256xf32> to vector<8x256xf32>
    %181 = vector.shape_cast %178 : vector<8x256xf32> to vector<1x8x256xf32>
    tpu.vector_store %arg8[%c1_69, %c0_70, %c0_71], %181 {strides = array<i32>} : memref<2x8x256xf32, #tpu.memory_space<vmem>>, vector<1x8x256xf32>,
    return
  }
}

</mosaic_0001>

<llo_original>
// kernel: tpu_custom_call.1
$region0: #{tpu_custom_call.1}
  #allocation0 [shape = 'u32[]', space=smem, size = 0x4, offset = 0x4, fixed_abs, tag = 'smem constant byte address 0x4 - core index']
  #allocation1 [shape = 'u32[144,128]{1,0:T(1,128)}', space=vmem, size = 0x12000, scoped, tag = 'internal scratch']
  %s0 = inlined_call_operand.vmem [shape: f32[2,4,256], index: 0, kind: input, shape index: {}]
  %s1 = inlined_call_operand.vmem [shape: f32[8,36], index: 1, kind: input, shape index: {}]
  %s2 = inlined_call_operand.vmem [shape: f32[8,1], index: 2, kind: input, shape index: {}]
  %s3 = inlined_call_operand.vmem [shape: f32[8,1], index: 3, kind: input, shape index: {}]
  %s4 = inlined_call_operand.vmem [shape: f32[8,1], index: 4, kind: input, shape index: {}]
  %s5 = inlined_call_operand.hbm [shape: f32[8,72], index: 5, kind: input, shape index: {}]
  %s6 = inlined_call_operand.vmem [shape: f32[8,1], index: 6, kind: input, shape index: {}]
  %s7 = inlined_call_operand.vmem [shape: f32[9,256], index: 7, kind: input, shape index: {}]
  %s8 = inlined_call_operand.hbm [shape: f32[2,8,256], index: 8, kind: output, shape index: {}]
  %s9 = sld [smem:[#allocation0]]
  $region46: #{tpu_custom_call.1} parent=0
    _
  %s11 = ssub.s32 1, %s9
  %s12 = scalar_select 0, %s11, %s9
  $region1: #{tpu_custom_call.1} parent=0
    #allocation2 [shape = 'u8[4096]{0}', space=vmem, size = 0x1000, scoped, tag = 'input window, operand 5, single buffered']
    #allocation3 [shape = 's32[1]{0}', space=sflag, size = 0x4, scoped, tag = 'scoped memory for tpu_custom_call.1']
    #allocation4 [shape = 's32[1]{0}', space=sflag, size = 0x4, scoped, tag = 'scoped memory for tpu_custom_call.1']
    #allocation5 [shape = 'u8[16384]{0}', space=vmem, size = 0x4000, scoped, tag = 'output window, operand 0, single buffered']
    %13 = vsyncpa [#allocation3], 0
    %14 = vsyncpa [#allocation4], 0
    // Predicated region
    $region2: #{tpu_custom_call.1} parent=1 // pred_check
      _
    $region3: #{tpu_custom_call.1} parent=1 // pred_check_branch
      %16 = sbr.rel (0) target = $region5
    $region4: #{tpu_custom_call.1} parent=1 // pred_region
      _
    $region5: #{tpu_custom_call.1} parent=1 // pred_fallthru
      _
    // Predicated region
    $region6: #{tpu_custom_call.1} parent=1 // pred_check
      _
    $region7: #{tpu_custom_call.1} parent=1 // pred_check_branch
      %18 = sbr.rel (0) target = $region9
    $region8: #{tpu_custom_call.1} parent=1 // pred_region
      _
    $region9: #{tpu_custom_call.1} parent=1 // pred_fallthru
      _
    // Predicated region
    $region10: #{tpu_custom_call.1} parent=1 // pred_check
      _
    $region11: #{tpu_custom_call.1} parent=1 // pred_check_branch
      %20 = sbr.rel (0) target = $region13
    $region12: #{tpu_custom_call.1} parent=1 // pred_region
      _
    $region13: #{tpu_custom_call.1} parent=1 // pred_fallthru
      _
    // Predicated region
    $region14: #{tpu_custom_call.1} parent=1 // pred_check
      _
    $region15: #{tpu_custom_call.1} parent=1 // pred_check_branch
      %22 = sbr.rel (0) target = $region17
    $region16: #{tpu_custom_call.1} parent=1 // pred_region
      _
    $region17: #{tpu_custom_call.1} parent=1 // pred_fallthru
      _
    // Predicated region
    $region18: #{tpu_custom_call.1} parent=1 // pred_check
      _
    $region19: #{tpu_custom_call.1} parent=1 // pred_check_branch
      %24 = sbr.rel (0) target = $region21
    $region20: #{tpu_custom_call.1} parent=1 // pred_region
      _
    $region21: #{tpu_custom_call.1} parent=1 // pred_fallthru
      _
    // Predicated region
    $region22: #{tpu_custom_call.1} parent=1 // pred_check
      _
    $region23: #{tpu_custom_call.1} parent=1 // pred_check_branch
      %26 = sbr.rel (0) target = $region25
    $region24: #{tpu_custom_call.1} parent=1 // pred_region
      %s28 = ssub.s32 128, 128
      %29 = vsyncadd [#allocation3], %s28
      %s31 = sshll.u32 [#allocation2], 4
      %s32 = int_to_ptr.vmem [resolvable:$true] %s31
      %34 = dma.hbm_to_vmem [thread:$0]  %s5, 128, %s32, [#allocation3]
    $region25: #{tpu_custom_call.1} parent=1 // pred_fallthru
      _
    // Predicated region
    $region26: #{tpu_custom_call.1} parent=1 // pred_check
      _
    $region27: #{tpu_custom_call.1} parent=1 // pred_check_branch
      %36 = sbr.rel (0) target = $region29
    $region28: #{tpu_custom_call.1} parent=1 // pred_region
      _
    $region29: #{tpu_custom_call.1} parent=1 // pred_fallthru
      _
    // Predicated region
    $region30: #{tpu_custom_call.1} parent=1 // pred_check
      _
    $region31: #{tpu_custom_call.1} parent=1 // pred_check_branch
      %38 = sbr.rel (0) target = $region33
    $region32: #{tpu_custom_call.1} parent=1 // pred_region
      _
    $region33: #{tpu_custom_call.1} parent=1 // pred_fallthru
      _
    // Predicated region
    $region34: #{tpu_custom_call.1} parent=1 // pred_check
      _
    $region35: #{tpu_custom_call.1} parent=1 // pred_check_branch
      %40 = sbr.rel (0) target = $region37
    $region36: #{tpu_custom_call.1} parent=1 // pred_region
      %41 = dma.done [#allocation3], 128
    $region37: #{tpu_custom_call.1} parent=1 // pred_fallthru
      _
    %v42 = vld [vmem:[%s7] ss:$8 sm:$0x3]
    %s43 = scalar_lea.vmem %s7, 1
    %v44 = vld [vmem:[%s43] ss:$8 sm:$0x3]
    %s45 = scalar_lea.vmem %s7, 2
    %v46 = vld [vmem:[%s45] ss:$8 sm:$0x3]
    %s47 = scalar_lea.vmem %s7, 3
    %v48 = vld [vmem:[%s47] ss:$8 sm:$0x3]
    %s49 = scalar_lea.vmem %s7, 5
    %v50 = vld [vmem:[%s49] ss:$8 sm:$0x3]
    %s51 = scalar_lea.vmem %s7, 6
    %v52 = vld [vmem:[%s51] ss:$8 sm:$0x3]
    %s53 = scalar_lea.vmem %s7, 7
    %v54 = vld [vmem:[%s53] ss:$8 sm:$0x3]
    %s55 = scalar_lea.vmem %s7, 16
    %v56 = vld [vmem:[%s55] ss:$8 sm:$0x3]
    %v57 = vld [vmem:[%s1] sm:$0xff]
    %v58 = vld [vmem:[#allocation2] sm:$0xff]
    %v59 = vld [vmem:[%s2] sm:$0xff]
    %v60 = vld [vmem:[%s6] sm:$0xff]
    %v61 = vld [vmem:[%s0] sm:$0xff]
    %v63 = vcombine.high %v61, %v61
    %65 = vrot.lane.b32.xlu0 %v61, 17
    %v66 = vpop.permute.xlu0 %65
    %67 = vrot.lane.b32.xlu0 %v63, 17
    %v68 = vpop.permute.xlu0 %67
    %v69 = vlaneseq
    %v70 = vand.u32 %v69, 127
    %vm71 = vcmp.lt.s32.totalorder %v70, 17
    %v72 = vsel %vm71, %v66, %v68
    %v73 = vsel %vm71, %v68, %v66
    %v75 = vlaneseq
    %v76 = vshrl.u32 %v75, 7
    %v77 = vsub.s32 0, %v76
    %v78 = vrot.slane %v42, %v77
    %v79 = vlaneseq
    %v80 = vshrl.u32 %v79, 7
    %v81 = vsub.s32 1, %v80
    %v82 = vrot.slane %v42, %v81
    %v85 = vmul.f32 %v73, %v78
    %v86 = vmul.f32 %v72, %v82
    %87 = vrot.lane.b32.xlu0 %v61, 16
    %v88 = vpop.permute.xlu0 %87
    %89 = vrot.lane.b32.xlu0 %v63, 16
    %v90 = vpop.permute.xlu0 %89
    %vm91 = vcmp.lt.s32.totalorder %v70, 16
    %v92 = vsel %vm91, %v88, %v90
    %v93 = vsel %vm91, %v90, %v88
    %v95 = vlaneseq
    %v96 = vshrl.u32 %v95, 7
    %v97 = vsub.s32 0, %v96
    %v98 = vrot.slane %v44, %v97
    %v99 = vlaneseq
    %v100 = vshrl.u32 %v99, 7
    %v101 = vsub.s32 1, %v100
    %v102 = vrot.slane %v44, %v101
    %v105 = vmul.f32 %v93, %v98
    %v106 = vmul.f32 %v92, %v102
    %107 = vrot.lane.b32.xlu0 %v61, 15
    %v108 = vpop.permute.xlu0 %107
    %109 = vrot.lane.b32.xlu0 %v63, 15
    %v110 = vpop.permute.xlu0 %109
    %vm111 = vcmp.lt.s32.totalorder %v70, 15
    %v112 = vsel %vm111, %v108, %v110
    %v113 = vsel %vm111, %v110, %v108
    %v115 = vlaneseq
    %v116 = vshrl.u32 %v115, 7
    %v117 = vsub.s32 0, %v116
    %v118 = vrot.slane %v46, %v117
    %v119 = vlaneseq
    %v120 = vshrl.u32 %v119, 7
    %v121 = vsub.s32 1, %v120
    %v122 = vrot.slane %v46, %v121
    %v125 = vmul.f32 %v113, %v118
    %v126 = vmul.f32 %v112, %v122
    %127 = vrot.lane.b32.xlu0 %v61, 1
    %v128 = vpop.permute.xlu0 %127
    %129 = vrot.lane.b32.xlu0 %v63, 1
    %v130 = vpop.permute.xlu0 %129
    %vm131 = vcmp.lt.s32.totalorder %v70, 1
    %v132 = vsel %vm131, %v128, %v130
    %v133 = vsel %vm131, %v130, %v128
    %v135 = vlaneseq
    %v136 = vshrl.u32 %v135, 7
    %v137 = vsub.s32 0, %v136
    %v138 = vrot.slane %v48, %v137
    %v139 = vlaneseq
    %v140 = vshrl.u32 %v139, 7
    %v141 = vsub.s32 1, %v140
    %v142 = vrot.slane %v48, %v141
    %v145 = vmul.f32 %v133, %v138
    %v146 = vmul.f32 %v132, %v142
    %147 = vrot.lane.b32.xlu0 %v61, 127
    %v148 = vpop.permute.xlu0 %147
    %149 = vrot.lane.b32.xlu0 %v63, 127
    %v150 = vpop.permute.xlu0 %149
    %vm151 = vcmp.lt.s32.totalorder %v70, 127
    %v152 = vsel %vm151, %v148, %v150
    %v153 = vsel %vm151, %v150, %v148
    %v155 = vlaneseq
    %v156 = vshrl.u32 %v155, 7
    %v157 = vsub.s32 0, %v156
    %v158 = vrot.slane %v50, %v157
    %v159 = vlaneseq
    %v160 = vshrl.u32 %v159, 7
    %v161 = vsub.s32 1, %v160
    %v162 = vrot.slane %v50, %v161
    %v165 = vmul.f32 %v152, %v158
    %v166 = vmul.f32 %v153, %v162
    %167 = vrot.lane.b32.xlu0 %v61, 113
    %v168 = vpop.permute.xlu0 %167
    %169 = vrot.lane.b32.xlu0 %v63, 113
    %v170 = vpop.permute.xlu0 %169
    %vm171 = vcmp.lt.s32.totalorder %v70, 113
    %v172 = vsel %vm171, %v168, %v170
    %v173 = vsel %vm171, %v170, %v168
    %v175 = vlaneseq
    %v176 = vshrl.u32 %v175, 7
    %v177 = vsub.s32 0, %v176
    %v178 = vrot.slane %v52, %v177
    %v179 = vlaneseq
    %v180 = vshrl.u32 %v179, 7
    %v181 = vsub.s32 1, %v180
    %v182 = vrot.slane %v52, %v181
    %v185 = vmul.f32 %v172, %v178
    %v186 = vmul.f32 %v173, %v182
    %187 = vrot.lane.b32.xlu0 %v61, 112
    %v188 = vpop.permute.xlu0 %187
    %189 = vrot.lane.b32.xlu0 %v63, 112
    %v190 = vpop.permute.xlu0 %189
    %vm191 = vcmp.lt.s32.totalorder %v70, 112
    %v192 = vsel %vm191, %v188, %v190
    %v193 = vsel %vm191, %v190, %v188
    %v195 = vlaneseq
    %v196 = vshrl.u32 %v195, 7
    %v197 = vsub.s32 0, %v196
    %v198 = vrot.slane %v54, %v197
    %v199 = vlaneseq
    %v200 = vshrl.u32 %v199, 7
    %v201 = vsub.s32 1, %v200
    %v202 = vrot.slane %v54, %v201
    %v205 = vmul.f32 %v192, %v198
    %v206 = vmul.f32 %v193, %v202
    %207 = vrot.lane.b32.xlu0 %v61, 111
    %v208 = vpop.permute.xlu0 %207
    %209 = vrot.lane.b32.xlu0 %v63, 111
    %v210 = vpop.permute.xlu0 %209
    %vm211 = vcmp.lt.s32.totalorder %v70, 111
    %v212 = vsel %vm211, %v208, %v210
    %v213 = vsel %vm211, %v210, %v208
    %v215 = vlaneseq
    %v216 = vshrl.u32 %v215, 7
    %v217 = vsub.s32 0, %v216
    %v218 = vrot.slane %v56, %v217
    %v219 = vlaneseq
    %v220 = vshrl.u32 %v219, 7
    %v221 = vsub.s32 1, %v220
    %v222 = vrot.slane %v56, %v221
    %v225 = vmul.f32 %v212, %v218
    %v226 = vmul.f32 %v213, %v222
    %v229 = vrot.slane %v105, 4
    %v230 = vrot.slane %v106, 4
    %v235 = vrot.slane %v145, 4
    %v236 = vrot.slane %v146, 4
    %v241 = vrot.slane %v165, 4
    %v242 = vrot.slane %v166, 4
    %v247 = vrot.slane %v205, 4
    %v248 = vrot.slane %v206, 4
    %vm251 = vcmask 1043456
    %v252 = vsel %vm251, %v85, %v229
    %v253 = vsel %vm251, %v86, %v230
    %v254 = vsel %vm251, %v125, %v235
    %v255 = vsel %vm251, %v126, %v236
    %v256 = vsel %vm251, %v61, %v241
    %v257 = vsel %vm251, %v63, %v242
    %v258 = vsel %vm251, %v185, %v247
    %v259 = vsel %vm251, %v186, %v248
    %261 = vset.pattern.permute.xlu0 0
    %262 = vperm.xlu0 %261, %v59
    %v263 = vpop.permute.xlu0 %262
    %vm265 = vcmask 293888
    %v267 = vsel %vm265, %v57, 0
    %v270 = vsel %vm251, %v225, 0
    %v273 = vsel %vm251, %v226, 0
    %275 = vmatprep.subr.mxu0 %v253
    %276 = vmatpush1.msra.mxu0 %v252
    %277 = vmatprep.subr.mxu0 %v255
    %278 = vmatpush1.msra.mxu0 %v254
    %279 = vmatprep.subr.mxu0 %v257
    %280 = vmatpush1.msra.mxu0 %v256
    %281 = vmatprep.subr.mxu0 %v259
    %282 = vmatpush1.msra.mxu0 %v258
    %283 = vmatprep.subr.mxu0 %v273
    %284 = vmatpush1.msra.mxu0 %v270
    %285 = vmatprep.subr.mxu0 0.0
    %286 = vmatpush1.msra.mxu0 0.0
    %287 = vmatprep.subr.mxu0 0.0
    %288 = vmatpush1.msra.mxu0 0.0
    %289 = vmatprep.subr.mxu0 0.0
    %290 = vmatpush1.msra.mxu0 0.0
    %291 = vmatprep.subr.mxu0 0.0
    %292 = vmatpush1.msra.mxu0 0.0
    %293 = vmatprep.subr.mxu0 0.0
    %294 = vmatpush1.msra.mxu0 0.0
    %295 = vmatprep.subr.mxu0 0.0
    %296 = vmatpush1.msra.mxu0 0.0
    %297 = vmatprep.subr.mxu0 0.0
    %298 = vmatpush1.msra.mxu0 0.0
    %299 = vmatprep.subr.mxu0 0.0
    %300 = vmatpush1.msra.mxu0 0.0
    %301 = vmatprep.subr.mxu0 0.0
    %302 = vmatpush1.msra.mxu0 0.0
    %303 = vmatprep.subr.mxu0 0.0
    %304 = vmatpush1.msra.mxu0 0.0
    %305 = vmatprep.subr.mxu0 0.0
    %306 = vmatpush1.msra.mxu0 0.0
    %307 = vmatprep.subr.mxu0 0.0
    %308 = vmatpush1.msra.mxu0 0.0
    %309 = vmatprep.subr.mxu0 0.0
    %310 = vmatpush1.msra.mxu0 0.0
    %311 = vmatprep.subr.mxu0 0.0
    %312 = vmatpush1.msra.mxu0 0.0
    %313 = vmatprep.subr.mxu0 0.0
    %314 = vmatpush1.msra.mxu0 0.0
    %315 = vmatprep.subr.mxu0 0.0
    %316 = vmatpush1.msra.mxu0 0.0
    %317 = vmatprep.subr.mxu0 0.0
    %318 = vmatpush1.msra.mxu0 0.0
    %319 = vmatprep.subr.mxu0 0.0
    %320 = vmatpush1.msra.mxu0 0.0
    %321 = vmatprep.subr.mxu0 0.0
    %322 = vmatpush1.msra.mxu0 0.0
    %323 = vmatprep.subr.mxu0 0.0
    %324 = vmatpush1.msra.mxu0 0.0
    %325 = vmatprep.subr.mxu0 0.0
    %326 = vmatpush1.msra.mxu0 0.0
    %327 = vmatprep.subr.mxu0 0.0
    %328 = vmatpush1.msra.mxu0 0.0
    %329 = vmatprep.subr.mxu0 0.0
    %330 = vmatpush1.msra.mxu0 0.0
    %331 = vmatprep.subr.mxu0 0.0
    %332 = vmatpush1.msra.mxu0 0.0
    %333 = vmatprep.subr.mxu0 0.0
    %334 = vmatpush1.msra.mxu0 0.0
    %335 = vmatprep.subr.mxu0 0.0
    %336 = vmatpush1.msra.mxu0 0.0
    %337 = vmatprep.subr.mxu0 0.0
    %338 = vmatpush1.msra.mxu0 0.0
    %339 = vmatprep.mubr.f32.mxu0 0.0
    %340 = vmatmul.mubr.f32.gmra.mrb[0].mxu0 %v267
    %v341 = vpop.f32.mrb[0].mxu0
    %v342 = vadd.f32 %v263, %v341
    %v343 = vpop.f32.mrb[0].mxu0
    %v344 = vadd.f32 %v263, %v343
    %345 = vdwg.mxu0
    %v346 = vmax.f32 %v342, 0.0
    %v347 = vmax.f32 %v344, 0.0
    %v348 = vadd.f32 %v346, %v347
    %349 = vadd.xlane.f32.xlu0 %v348
    %v350 = vpop.xlane.xlu0 %349
    %v351 = vadd.f32 %v350, 0.0
    %s352 = scalar_lea.vmem %s0, 8
    %v353 = vld [vmem:[%s352] sm:$0xff]
    %v355 = vcombine.high %v353, %v353
    %357 = vrot.lane.b32.xlu0 %v353, 17
    %v358 = vpop.permute.xlu0 %357
    %359 = vrot.lane.b32.xlu0 %v355, 17
    %v360 = vpop.permute.xlu0 %359
    %v361 = vsel %vm71, %v358, %v360
    %v362 = vsel %vm71, %v360, %v358
    %v363 = vmul.f32 %v362, %v78
    %v364 = vmul.f32 %v361, %v82
    %365 = vrot.lane.b32.xlu0 %v353, 16
    %v366 = vpop.permute.xlu0 %365
    %367 = vrot.lane.b32.xlu0 %v355, 16
    %v368 = vpop.permute.xlu0 %367
    %v369 = vsel %vm91, %v366, %v368
    %v370 = vsel %vm91, %v368, %v366
    %v371 = vmul.f32 %v370, %v98
    %v372 = vmul.f32 %v369, %v102
    %373 = vrot.lane.b32.xlu0 %v353, 15
    %v374 = vpop.permute.xlu0 %373
    %375 = vrot.lane.b32.xlu0 %v355, 15
    %v376 = vpop.permute.xlu0 %375
    %v377 = vsel %vm111, %v374, %v376
    %v378 = vsel %vm111, %v376, %v374
    %v379 = vmul.f32 %v378, %v118
    %v380 = vmul.f32 %v377, %v122
    %381 = vrot.lane.b32.xlu0 %v353, 1
    %v382 = vpop.permute.xlu0 %381
    %383 = vrot.lane.b32.xlu0 %v355, 1
    %v384 = vpop.permute.xlu0 %383
    %v385 = vsel %vm131, %v382, %v384
    %v386 = vsel %vm131, %v384, %v382
    %v387 = vmul.f32 %v386, %v138
    %v388 = vmul.f32 %v385, %v142
    %389 = vrot.lane.b32.xlu0 %v353, 127
    %v390 = vpop.permute.xlu0 %389
    %391 = vrot.lane.b32.xlu0 %v355, 127
    %v392 = vpop.permute.xlu0 %391
    %v393 = vsel %vm151, %v390, %v392
    %v394 = vsel %vm151, %v392, %v390
    %v395 = vmul.f32 %v393, %v158
    %v396 = vmul.f32 %v394, %v162
    %397 = vrot.lane.b32.xlu0 %v353, 113
    %v398 = vpop.permute.xlu0 %397
    %399 = vrot.lane.b32.xlu0 %v355, 113
    %v400 = vpop.permute.xlu0 %399
    %v401 = vsel %vm171, %v398, %v400
    %v402 = vsel %vm171, %v400, %v398
    %v403 = vmul.f32 %v401, %v178
    %v404 = vmul.f32 %v402, %v182
    %405 = vrot.lane.b32.xlu0 %v353, 112
    %v406 = vpop.permute.xlu0 %405
    %407 = vrot.lane.b32.xlu0 %v355, 112
    %v408 = vpop.permute.xlu0 %407
    %v409 = vsel %vm191, %v406, %v408
    %v410 = vsel %vm191, %v408, %v406
    %v411 = vmul.f32 %v409, %v198
    %v412 = vmul.f32 %v410, %v202
    %413 = vrot.lane.b32.xlu0 %v353, 111
    %v414 = vpop.permute.xlu0 %413
    %415 = vrot.lane.b32.xlu0 %v355, 111
    %v416 = vpop.permute.xlu0 %415
    %v417 = vsel %vm211, %v414, %v416
    %v418 = vsel %vm211, %v416, %v414
    %v419 = vmul.f32 %v417, %v218
    %v420 = vmul.f32 %v418, %v222
    %v423 = vrot.slane %v371, 4
    %v424 = vrot.slane %v372, 4
    %v429 = vrot.slane %v387, 4
    %v430 = vrot.slane %v388, 4
    %v435 = vrot.slane %v395, 4
    %v436 = vrot.slane %v396, 4
    %v441 = vrot.slane %v411, 4
    %v442 = vrot.slane %v412, 4
    %v445 = vsel %vm251, %v363, %v423
    %v446 = vsel %vm251, %v364, %v424
    %v447 = vsel %vm251, %v379, %v429
    %v448 = vsel %vm251, %v380, %v430
    %v449 = vsel %vm251, %v353, %v435
    %v450 = vsel %vm251, %v355, %v436
    %v451 = vsel %vm251, %v403, %v441
    %v452 = vsel %vm251, %v404, %v442
    %v454 = vsel %vm251, %v419, 0
    %v457 = vsel %vm251, %v420, 0
    %459 = vmatprep.subr.mxu0 %v446
    %460 = vmatpush1.msra.mxu0 %v445
    %461 = vmatprep.subr.mxu0 %v448
    %462 = vmatpush1.msra.mxu0 %v447
    %463 = vmatprep.subr.mxu0 %v450
    %464 = vmatpush1.msra.mxu0 %v449
    %465 = vmatprep.subr.mxu0 %v452
    %466 = vmatpush1.msra.mxu0 %v451
    %467 = vmatprep.subr.mxu0 %v457
    %468 = vmatpush1.msra.mxu0 %v454
    %469 = vmatprep.subr.mxu0 0.0
    %470 = vmatpush1.msra.mxu0 0.0
    %471 = vmatprep.subr.mxu0 0.0
    %472 = vmatpush1.msra.mxu0 0.0
    %473 = vmatprep.subr.mxu0 0.0
    %474 = vmatpush1.msra.mxu0 0.0
    %475 = vmatprep.subr.mxu0 0.0
    %476 = vmatpush1.msra.mxu0 0.0
    %477 = vmatprep.subr.mxu0 0.0
    %478 = vmatpush1.msra.mxu0 0.0
    %479 = vmatprep.subr.mxu0 0.0
    %480 = vmatpush1.msra.mxu0 0.0
    %481 = vmatprep.subr.mxu0 0.0
    %482 = vmatpush1.msra.mxu0 0.0
    %483 = vmatprep.subr.mxu0 0.0
    %484 = vmatpush1.msra.mxu0 0.0
    %485 = vmatprep.subr.mxu0 0.0
    %486 = vmatpush1.msra.mxu0 0.0
    %487 = vmatprep.subr.mxu0 0.0
    %488 = vmatpush1.msra.mxu0 0.0
    %489 = vmatprep.subr.mxu0 0.0
    %490 = vmatpush1.msra.mxu0 0.0
    %491 = vmatprep.subr.mxu0 0.0
    %492 = vmatpush1.msra.mxu0 0.0
    %493 = vmatprep.subr.mxu0 0.0
    %494 = vmatpush1.msra.mxu0 0.0
    %495 = vmatprep.subr.mxu0 0.0
    %496 = vmatpush1.msra.mxu0 0.0
    %497 = vmatprep.subr.mxu0 0.0
    %498 = vmatpush1.msra.mxu0 0.0
    %499 = vmatprep.subr.mxu0 0.0
    %500 = vmatpush1.msra.mxu0 0.0
    %501 = vmatprep.subr.mxu0 0.0
    %502 = vmatpush1.msra.mxu0 0.0
    %503 = vmatprep.subr.mxu0 0.0
    %504 = vmatpush1.msra.mxu0 0.0
    %505 = vmatprep.subr.mxu0 0.0
    %506 = vmatpush1.msra.mxu0 0.0
    %507 = vmatprep.subr.mxu0 0.0
    %508 = vmatpush1.msra.mxu0 0.0
    %509 = vmatprep.subr.mxu0 0.0
    %510 = vmatpush1.msra.mxu0 0.0
    %511 = vmatprep.subr.mxu0 0.0
    %512 = vmatpush1.msra.mxu0 0.0
    %513 = vmatprep.subr.mxu0 0.0
    %514 = vmatpush1.msra.mxu0 0.0
    %515 = vmatprep.subr.mxu0 0.0
    %516 = vmatpush1.msra.mxu0 0.0
    %517 = vmatprep.subr.mxu0 0.0
    %518 = vmatpush1.msra.mxu0 0.0
    %519 = vmatprep.subr.mxu0 0.0
    %520 = vmatpush1.msra.mxu0 0.0
    %521 = vmatprep.subr.mxu0 0.0
    %522 = vmatpush1.msra.mxu0 0.0
    %523 = vmatprep.mubr.f32.mxu0 0.0
    %524 = vmatmul.mubr.f32.gmra.mrb[0].mxu0 %v267
    %v525 = vpop.f32.mrb[0].mxu0
    %v526 = vadd.f32 %v263, %v525
    %v527 = vpop.f32.mrb[0].mxu0
    %v528 = vadd.f32 %v263, %v527
    %529 = vdwg.mxu0
    %v530 = vmax.f32 %v526, 0.0
    %v531 = vmax.f32 %v528, 0.0
    %v532 = vadd.f32 %v530, %v531
    %533 = vadd.xlane.f32.xlu0 %v532
    %v534 = vpop.xlane.xlu0 %533
    %v535 = vadd.f32 %v351, %v534
    %v536 = vmul.f32 %v535, 0.001953125
    %v537 = vsub.f32 %v346, %v536
    %v538 = vsub.f32 %v347, %v536
    %v539 = vmul.f32 %v537, %v537
    %v540 = vmul.f32 %v538, %v538
    %v541 = vadd.f32 %v539, %v540
    %542 = vadd.xlane.f32.xlu0 %v541
    %v543 = vpop.xlane.xlu0 %542
    %v544 = vadd.f32 %v543, 0.0
    %v545 = vsub.f32 %v530, %v536
    %v546 = vsub.f32 %v531, %v536
    %v547 = vmul.f32 %v545, %v545
    %v548 = vmul.f32 %v546, %v546
    %v549 = vadd.f32 %v547, %v548
    %550 = vadd.xlane.f32.xlu0 %v549
    %v551 = vpop.xlane.xlu0 %550
    %v552 = vadd.f32 %v544, %v551
    %v553 = vmul.f32 %v552, 0.001953125
    %v554 = vadd.f32 %v553, 1e-05
    %v555 = vrsqrt.pop %v554
    %v556 = vld [vmem:[%s3] sm:$0xff]
    %v557 = vmul.f32 %v556, %v555
    %v558 = vld [vmem:[%s4] sm:$0xff]
    %v559 = vmul.f32 %v536, %v557
    %v560 = vsub.f32 %v558, %v559
    %562 = vset.pattern.permute.xlu0 0
    %563 = vperm.xlu0 %562, %v557
    %v564 = vpop.permute.xlu0 %563
    %v566 = vmul.f32 %v346, %v564
    %v567 = vmul.f32 %v347, %v564
    %569 = vset.pattern.permute.xlu0 0
    %570 = vperm.xlu0 %569, %v560
    %v571 = vpop.permute.xlu0 %570
    %v573 = vadd.f32 %v566, %v571
    %v574 = vadd.f32 %v567, %v571
    %575 = vrot.lane.b32.xlu0 %v573, 17
    %v576 = vpop.permute.xlu0 %575
    %577 = vrot.lane.b32.xlu0 %v574, 17
    %v578 = vpop.permute.xlu0 %577
    %v579 = vsel %vm71, %v576, %v578
    %v580 = vsel %vm71, %v578, %v576
    %v581 = vmul.f32 %v580, %v78
    %v582 = vmul.f32 %v579, %v82
    %583 = vrot.lane.b32.xlu0 %v573, 16
    %v584 = vpop.permute.xlu0 %583
    %585 = vrot.lane.b32.xlu0 %v574, 16
    %v586 = vpop.permute.xlu0 %585
    %v587 = vsel %vm91, %v584, %v586
    %v588 = vsel %vm91, %v586, %v584
    %v589 = vmul.f32 %v588, %v98
    %v590 = vmul.f32 %v587, %v102
    %591 = vrot.lane.b32.xlu0 %v573, 15
    %v592 = vpop.permute.xlu0 %591
    %593 = vrot.lane.b32.xlu0 %v574, 15
    %v594 = vpop.permute.xlu0 %593
    %v595 = vsel %vm111, %v592, %v594
    %v596 = vsel %vm111, %v594, %v592
    %v597 = vmul.f32 %v596, %v118
    %v598 = vmul.f32 %v595, %v122
    %599 = vrot.lane.b32.xlu0 %v573, 1
    %v600 = vpop.permute.xlu0 %599
    %601 = vrot.lane.b32.xlu0 %v574, 1
    %v602 = vpop.permute.xlu0 %601
    %v603 = vsel %vm131, %v600, %v602
    %v604 = vsel %vm131, %v602, %v600
    %v605 = vmul.f32 %v604, %v138
    %v606 = vmul.f32 %v603, %v142
    %607 = vrot.lane.b32.xlu0 %v573, 127
    %v608 = vpop.permute.xlu0 %607
    %609 = vrot.lane.b32.xlu0 %v574, 127
    %v610 = vpop.permute.xlu0 %609
    %v611 = vsel %vm151, %v608, %v610
    %v612 = vsel %vm151, %v610, %v608
    %v613 = vmul.f32 %v611, %v158
    %v614 = vmul.f32 %v612, %v162
    %615 = vrot.lane.b32.xlu0 %v573, 113
    %v616 = vpop.permute.xlu0 %615
    %617 = vrot.lane.b32.xlu0 %v574, 113
    %v618 = vpop.permute.xlu0 %617
    %v619 = vsel %vm171, %v616, %v618
    %v620 = vsel %vm171, %v618, %v616
    %v621 = vmul.f32 %v619, %v178
    %v622 = vmul.f32 %v620, %v182
    %623 = vrot.lane.b32.xlu0 %v573, 112
    %v624 = vpop.permute.xlu0 %623
    %625 = vrot.lane.b32.xlu0 %v574, 112
    %v626 = vpop.permute.xlu0 %625
    %v627 = vsel %vm191, %v624, %v626
    %v628 = vsel %vm191, %v626, %v624
    %v629 = vmul.f32 %v627, %v198
    %v630 = vmul.f32 %v628, %v202
    %631 = vrot.lane.b32.xlu0 %v573, 111
    %v632 = vpop.permute.xlu0 %631
    %633 = vrot.lane.b32.xlu0 %v574, 111
    %v634 = vpop.permute.xlu0 %633
    %v635 = vsel %vm211, %v632, %v634
    %v636 = vsel %vm211, %v634, %v632
    %v637 = vmul.f32 %v635, %v218
    %v638 = vmul.f32 %v636, %v222
    %640 = vset.pattern.permute.xlu0 0
    %641 = vperm.xlu0 %640, %v60
    %v642 = vpop.permute.xlu0 %641
    %vm644 = vcmask 588800
    %v646 = vsel %vm644, %v58, 0
    %648 = vmatprep.subr.mxu0 %v582
    %649 = vmatpush1.msra.mxu0 %v581
    %650 = vmatprep.subr.mxu0 %v590
    %651 = vmatpush1.msra.mxu0 %v589
    %652 = vmatprep.subr.mxu0 %v598
    %653 = vmatpush1.msra.mxu0 %v597
    %654 = vmatprep.subr.mxu0 %v606
    %655 = vmatpush1.msra.mxu0 %v605
    %656 = vmatprep.subr.mxu0 %v574
    %657 = vmatpush1.msra.mxu0 %v573
    %658 = vmatprep.subr.mxu0 %v614
    %659 = vmatpush1.msra.mxu0 %v613
    %660 = vmatprep.subr.mxu0 %v622
    %661 = vmatpush1.msra.mxu0 %v621
    %662 = vmatprep.subr.mxu0 %v630
    %663 = vmatpush1.msra.mxu0 %v629
    %664 = vmatprep.subr.mxu0 %v638
    %665 = vmatpush1.msra.mxu0 %v637
    %666 = vmatprep.subr.mxu0 0.0
    %667 = vmatpush1.msra.mxu0 0.0
    %668 = vmatprep.subr.mxu0 0.0
    %669 = vmatpush1.msra.mxu0 0.0
    %670 = vmatprep.subr.mxu0 0.0
    %671 = vmatpush1.msra.mxu0 0.0
    %672 = vmatprep.subr.mxu0 0.0
    %673 = vmatpush1.msra.mxu0 0.0
    %674 = vmatprep.subr.mxu0 0.0
    %675 = vmatpush1.msra.mxu0 0.0
    %676 = vmatprep.subr.mxu0 0.0
    %677 = vmatpush1.msra.mxu0 0.0
    %678 = vmatprep.subr.mxu0 0.0
    %679 = vmatpush1.msra.mxu0 0.0
    %680 = vmatprep.subr.mxu0 0.0
    %681 = vmatpush1.msra.mxu0 0.0
    %682 = vmatprep.subr.mxu0 0.0
    %683 = vmatpush1.msra.mxu0 0.0
    %684 = vmatprep.subr.mxu0 0.0
    %685 = vmatpush1.msra.mxu0 0.0
    %686 = vmatprep.subr.mxu0 0.0
    %687 = vmatpush1.msra.mxu0 0.0
    %688 = vmatprep.subr.mxu0 0.0
    %689 = vmatpush1.msra.mxu0 0.0
    %690 = vmatprep.subr.mxu0 0.0
    %691 = vmatpush1.msra.mxu0 0.0
    %692 = vmatprep.subr.mxu0 0.0
    %693 = vmatpush1.msra.mxu0 0.0
    %694 = vmatprep.subr.mxu0 0.0
    %695 = vmatpush1.msra.mxu0 0.0
    %696 = vmatprep.subr.mxu0 0.0
    %697 = vmatpush1.msra.mxu0 0.0
    %698 = vmatprep.subr.mxu0 0.0
    %699 = vmatpush1.msra.mxu0 0.0
    %700 = vmatprep.subr.mxu0 0.0
    %701 = vmatpush1.msra.mxu0 0.0
    %702 = vmatprep.subr.mxu0 0.0
    %703 = vmatpush1.msra.mxu0 0.0
    %704 = vmatprep.subr.mxu0 0.0
    %705 = vmatpush1.msra.mxu0 0.0
    %706 = vmatprep.subr.mxu0 0.0
    %707 = vmatpush1.msra.mxu0 0.0
    %708 = vmatprep.subr.mxu0 0.0
    %709 = vmatpush1.msra.mxu0 0.0
    %710 = vmatprep.subr.mxu0 0.0
    %711 = vmatpush1.msra.mxu0 0.0
    %712 = vmatprep.mubr.f32.mxu0 0.0
    %713 = vmatmul.mubr.f32.gmra.mrb[0].mxu0 %v646
    %v714 = vpop.f32.mrb[0].mxu0
    %v715 = vadd.f32 %v642, %v714
    %v716 = vpop.f32.mrb[0].mxu0
    %v717 = vadd.f32 %v642, %v716
    %718 = vdwg.mxu0
    %v719 = vmax.f32 %v715, 0.0
    %v720 = vmax.f32 %v717, 0.0
    %721 = vst [vmem:[#allocation5] sm:$0xff] %v719
    %722 = vst [vmem:[#allocation5 + $0x8] sm:$0xff] %v720
    %v723 = vmul.f32 %v530, %v564
    %v724 = vmul.f32 %v531, %v564
    %v725 = vadd.f32 %v723, %v571
    %v726 = vadd.f32 %v724, %v571
    %727 = vrot.lane.b32.xlu0 %v725, 17
    %v728 = vpop.permute.xlu0 %727
    %729 = vrot.lane.b32.xlu0 %v726, 17
    %v730 = vpop.permute.xlu0 %729
    %v731 = vsel %vm71, %v728, %v730
    %v732 = vsel %vm71, %v730, %v728
    %v733 = vmul.f32 %v732, %v78
    %v734 = vmul.f32 %v731, %v82
    %735 = vrot.lane.b32.xlu0 %v725, 16
    %v736 = vpop.permute.xlu0 %735
    %737 = vrot.lane.b32.xlu0 %v726, 16
    %v738 = vpop.permute.xlu0 %737
    %v739 = vsel %vm91, %v736, %v738
    %v740 = vsel %vm91, %v738, %v736
    %v741 = vmul.f32 %v740, %v98
    %v742 = vmul.f32 %v739, %v102
    %743 = vrot.lane.b32.xlu0 %v725, 15
    %v744 = vpop.permute.xlu0 %743
    %745 = vrot.lane.b32.xlu0 %v726, 15
    %v746 = vpop.permute.xlu0 %745
    %v747 = vsel %vm111, %v744, %v746
    %v748 = vsel %vm111, %v746, %v744
    %v749 = vmul.f32 %v748, %v118
    %v750 = vmul.f32 %v747, %v122
    %751 = vrot.lane.b32.xlu0 %v725, 1
    %v752 = vpop.permute.xlu0 %751
    %753 = vrot.lane.b32.xlu0 %v726, 1
    %v754 = vpop.permute.xlu0 %753
    %v755 = vsel %vm131, %v752, %v754
    %v756 = vsel %vm131, %v754, %v752
    %v757 = vmul.f32 %v756, %v138
    %v758 = vmul.f32 %v755, %v142
    %759 = vrot.lane.b32.xlu0 %v725, 127
    %v760 = vpop.permute.xlu0 %759
    %761 = vrot.lane.b32.xlu0 %v726, 127
    %v762 = vpop.permute.xlu0 %761
    %v763 = vsel %vm151, %v760, %v762
    %v764 = vsel %vm151, %v762, %v760
    %v765 = vmul.f32 %v763, %v158
    %v766 = vmul.f32 %v764, %v162
    %767 = vrot.lane.b32.xlu0 %v725, 113
    %v768 = vpop.permute.xlu0 %767
    %769 = vrot.lane.b32.xlu0 %v726, 113
    %v770 = vpop.permute.xlu0 %769
    %v771 = vsel %vm171, %v768, %v770
    %v772 = vsel %vm171, %v770, %v768
    %v773 = vmul.f32 %v771, %v178
    %v774 = vmul.f32 %v772, %v182
    %775 = vrot.lane.b32.xlu0 %v725, 112
    %v776 = vpop.permute.xlu0 %775
    %777 = vrot.lane.b32.xlu0 %v726, 112
    %v778 = vpop.permute.xlu0 %777
    %v779 = vsel %vm191, %v776, %v778
    %v780 = vsel %vm191, %v778, %v776
    %v781 = vmul.f32 %v779, %v198
    %v782 = vmul.f32 %v780, %v202
    %783 = vrot.lane.b32.xlu0 %v725, 111
    %v784 = vpop.permute.xlu0 %783
    %785 = vrot.lane.b32.xlu0 %v726, 111
    %v786 = vpop.permute.xlu0 %785
    %v787 = vsel %vm211, %v784, %v786
    %v788 = vsel %vm211, %v786, %v784
    %v789 = vmul.f32 %v787, %v218
    %v790 = vmul.f32 %v788, %v222
    %791 = vmatprep.subr.mxu0 %v734
    %792 = vmatpush1.msra.mxu0 %v733
    %793 = vmatprep.subr.mxu0 %v742
    %794 = vmatpush1.msra.mxu0 %v741
    %795 = vmatprep.subr.mxu0 %v750
    %796 = vmatpush1.msra.mxu0 %v749
    %797 = vmatprep.subr.mxu0 %v758
    %798 = vmatpush1.msra.mxu0 %v757
    %799 = vmatprep.subr.mxu0 %v726
    %800 = vmatpush1.msra.mxu0 %v725
    %801 = vmatprep.subr.mxu0 %v766
    %802 = vmatpush1.msra.mxu0 %v765
    %803 = vmatprep.subr.mxu0 %v774
    %804 = vmatpush1.msra.mxu0 %v773
    %805 = vmatprep.subr.mxu0 %v782
    %806 = vmatpush1.msra.mxu0 %v781
    %807 = vmatprep.subr.mxu0 %v790
    %808 = vmatpush1.msra.mxu0 %v789
    %809 = vmatprep.subr.mxu0 0.0
    %810 = vmatpush1.msra.mxu0 0.0
    %811 = vmatprep.subr.mxu0 0.0
    %812 = vmatpush1.msra.mxu0 0.0
    %813 = vmatprep.subr.mxu0 0.0
    %814 = vmatpush1.msra.mxu0 0.0
    %815 = vmatprep.subr.mxu0 0.0
    %816 = vmatpush1.msra.mxu0 0.0
    %817 = vmatprep.subr.mxu0 0.0
    %818 = vmatpush1.msra.mxu0 0.0
    %819 = vmatprep.subr.mxu0 0.0
    %820 = vmatpush1.msra.mxu0 0.0
    %821 = vmatprep.subr.mxu0 0.0
    %822 = vmatpush1.msra.mxu0 0.0
    %823 = vmatprep.subr.mxu0 0.0
    %824 = vmatpush1.msra.mxu0 0.0
    %825 = vmatprep.subr.mxu0 0.0
    %826 = vmatpush1.msra.mxu0 0.0
    %827 = vmatprep.subr.mxu0 0.0
    %828 = vmatpush1.msra.mxu0 0.0
    %829 = vmatprep.subr.mxu0 0.0
    %830 = vmatpush1.msra.mxu0 0.0
    %831 = vmatprep.subr.mxu0 0.0
    %832 = vmatpush1.msra.mxu0 0.0
    %833 = vmatprep.subr.mxu0 0.0
    %834 = vmatpush1.msra.mxu0 0.0
    %835 = vmatprep.subr.mxu0 0.0
    %836 = vmatpush1.msra.mxu0 0.0
    %837 = vmatprep.subr.mxu0 0.0
    %838 = vmatpush1.msra.mxu0 0.0
    %839 = vmatprep.subr.mxu0 0.0
    %840 = vmatpush1.msra.mxu0 0.0
    %841 = vmatprep.subr.mxu0 0.0
    %842 = vmatpush1.msra.mxu0 0.0
    %843 = vmatprep.subr.mxu0 0.0
    %844 = vmatpush1.msra.mxu0 0.0
    %845 = vmatprep.subr.mxu0 0.0
    %846 = vmatpush1.msra.mxu0 0.0
    %847 = vmatprep.subr.mxu0 0.0
    %848 = vmatpush1.msra.mxu0 0.0
    %849 = vmatprep.subr.mxu0 0.0
    %850 = vmatpush1.msra.mxu0 0.0
    %851 = vmatprep.subr.mxu0 0.0
    %852 = vmatpush1.msra.mxu0 0.0
    %853 = vmatprep.subr.mxu0 0.0
    %854 = vmatpush1.msra.mxu0 0.0
    %855 = vmatprep.mubr.f32.mxu0 0.0
    %856 = vmatmul.mubr.f32.gmra.mrb[0].mxu0 %v646
    %v857 = vpop.f32.mrb[0].mxu0
    %v858 = vadd.f32 %v642, %v857
    %v859 = vpop.f32.mrb[0].mxu0
    %v860 = vadd.f32 %v642, %v859
    %861 = vdwg.mxu0
    %v862 = vmax.f32 %v858, 0.0
    %v863 = vmax.f32 %v860, 0.0
    %s864 = scalar_lea.vmem [#allocation5], 16
    %865 = vst [vmem:[%s864] sm:$0xff] %v862
    %866 = vst [vmem:[%s864 + $0x8] sm:$0xff] %v863
    // Predicated region
    $region38: #{tpu_custom_call.1} parent=1 // pred_check
      _
    $region39: #{tpu_custom_call.1} parent=1 // pred_check_branch
      %868 = sbr.rel (0) target = $region41
    $region40: #{tpu_custom_call.1} parent=1 // pred_region
      %s870 = ssub.s32 512, 512
      %871 = vsyncadd [#allocation4], %s870
      %s872 = sshll.u32 [#allocation5], 4
      %s873 = int_to_ptr.vmem [resolvable:$true] %s872
      %878 = dma.vmem_to_hbm [thread:$0]  %s873, 512, %s8, [#allocation4], 256, 256, 16
    $region41: #{tpu_custom_call.1} parent=1 // pred_fallthru
      _
    // Predicated region
    $region42: #{tpu_custom_call.1} parent=1 // pred_check
      _
    $region43: #{tpu_custom_call.1} parent=1 // pred_check_branch
      %880 = sbr.rel (0) target = $region45
    $region44: #{tpu_custom_call.1} parent=1 // pred_region
      %881 = dma.done [#allocation4], 512
    $region45: #{tpu_custom_call.1} parent=1 // pred_fallthru
      _
    %882 = vsyncpa [#allocation3], 1
    %883 = vsyncpa [#allocation4], 1

</llo_original>
